<compile_context>
chip_gen: v7x
topology: tpu7x:2x2x1
jax: 0.10.0
libtpu: 0.0.40
codegen_flags: <defaults>
</compile_context>

<pallas_src>
from functools import partial

import numpy as np
import jax
import jax.numpy as jnp
from jax.experimental import pallas as pl
from jax.experimental.pallas import tpu as pltpu

LANE = 128


def _round_up(x, m):
    return ((x + m - 1) // m) * m


# ----------------------------------------------------------------------------
# Setup-time: LMU A/B state-space matrices + ZOH discretization (not hot path)
# ----------------------------------------------------------------------------
def gen_AB_base_matrices(order: int):
    Q = np.arange(order, dtype=np.float64)
    R = (2.0 * Q + 1.0)[:, None]
    j, i = np.meshgrid(Q, Q)
    A = np.where(i < j, -1.0, (-1.0) ** (i - j + 1)) * R
    B = ((-1.0) ** Q)[:, None] * R
    return A, B


def _expm_f64(M: np.ndarray) -> np.ndarray:
    """float64 scaling-and-squaring Taylor expm (setup only, tiny matrix)."""
    M = np.asarray(M, dtype=np.float64)
    s = 0
    nrm = np.linalg.norm(M, 1)
    while nrm > 0.5:
        M = M * 0.5
        nrm *= 0.5
        s += 1
    n = M.shape[0]
    E = np.eye(n)
    term = np.eye(n)
    for k in range(1, 25):
        term = term @ M / k
        E = E + term
    for _ in range(s):
        E = E @ E
    return E


def cont2discrete_zoh(A: np.ndarray, B: np.ndarray, dt: float = 1.0):
    order = A.shape[0]
    M = np.zeros((order + 1, order + 1), dtype=np.float64)
    M[:order, :order] = A
    M[:order, order:] = B
    expM = _expm_f64(M * dt)
    return expM[:order, :order], expM[:order, order:]


# ----------------------------------------------------------------------------
# Deterministic parameter init (shapes from LMUCell.__init__)
# ----------------------------------------------------------------------------
def lecun_uniform(key, shape):
    fan_in = shape[1]
    bound = float(np.sqrt(3.0 / fan_in))
    return jax.random.uniform(key, shape, jnp.float32, -bound, bound)


def xavier_normal(key, shape):
    fan_out, fan_in = shape
    std = float(np.sqrt(2.0 / (fan_in + fan_out)))
    return std * jax.random.normal(key, shape, jnp.float32)


def init_lmu_params(key, input_size, memory_d, order, hidden_size, theta):
    ks = jax.random.split(key, 6)
    params = {}
    params["e_x"] = lecun_uniform(ks[0], (memory_d, input_size))
    params["e_h"] = lecun_uniform(ks[1], (memory_d, hidden_size))
    params["e_m"] = jnp.zeros((memory_d, order * memory_d), jnp.float32)
    params["W_x"] = xavier_normal(ks[2], (hidden_size, input_size))
    params["W_h"] = xavier_normal(ks[3], (hidden_size, hidden_size))
    params["W_m"] = xavier_normal(ks[4], (hidden_size, order * memory_d))
    A0, B0 = gen_AB_base_matrices(order)
    Ad, Bd = cont2discrete_zoh(A0 / theta, B0 / theta, dt=1.0)
    params["A"] = jnp.asarray(Ad, jnp.float32)            # (order, order)
    params["B"] = jnp.asarray(Bd, jnp.float32)            # (order, 1)
    return params


# ----------------------------------------------------------------------------
# Setup-time weight fusion into ONE lane-aligned slab W_pad (K_P, N_P):
#
#   z = [x | h | m]  (conceptually); with
#     G_m = M_A_pad + E @ B_scatter          so  m_new = z @ G_m
#     G_h = [W_x^T;W_h^T;0] + G_m @ W_m^T    so  h_pre = z @ G_h
#   The x/h/m row segments are placed at 128-element row offsets
#   (0, IN_P, IN_P+H_P) and the m_new/h_pre column segments at 128-element
#   column offsets (0, MO_P); all pad entries are zero, so padded operands
#   produce exactly-zero pad outputs (safe to carry padded recurrent state).
# ----------------------------------------------------------------------------
def fuse_lmu_weights(params, dtype=jnp.float32):
    memory_d, input_size = params["e_x"].shape
    hidden_size = params["W_h"].shape[0]
    order = params["A"].shape[0]
    MO = memory_d * order

    E = jnp.concatenate([params["e_x"].T, params["e_h"].T, params["e_m"].T], axis=0)
    M_A = jnp.kron(jnp.eye(memory_d, dtype=jnp.float32), params["A"].T)      # (MO, MO)
    B_row = params["B"].reshape(1, order)
    B_scatter = jnp.kron(jnp.eye(memory_d, dtype=jnp.float32), B_row)        # (md, MO)

    M_A_pad = jnp.concatenate(
        [jnp.zeros((input_size + hidden_size, MO), jnp.float32), M_A], axis=0)
    G_m = M_A_pad + E @ B_scatter                                            # (F, MO)
    W_xh_pad = jnp.concatenate(
        [params["W_x"].T, params["W_h"].T,
         jnp.zeros((MO, hidden_size), jnp.float32)], axis=0)                 # (F, H)
    G_h = W_xh_pad + G_m @ params["W_m"].T                                   # (F, H)

    IN_P = _round_up(input_size, LANE)
    H_P = _round_up(hidden_size, LANE)
    MO_P = _round_up(MO, LANE)
    K_P = IN_P + H_P + MO_P
    N_P = MO_P + H_P

    w = jnp.zeros((K_P, N_P), jnp.float32)
    row_off = (0, IN_P, IN_P + H_P)
    segs = ((0, input_size), (input_size, hidden_size),
            (input_size + hidden_size, MO))
    for ro, (so, sl) in zip(row_off, segs):
        w = w.at[ro:ro + sl, 0:MO].set(G_m[so:so + sl])
        w = w.at[ro:ro + sl, MO_P:MO_P + hidden_size].set(G_h[so:so + sl])

    dims = dict(input_size=input_size, hidden_size=hidden_size, MO=MO,
                IN_P=IN_P, H_P=H_P, MO_P=MO_P, K_P=K_P, N_P=N_P)
    return w.astype(dtype), dims


# ----------------------------------------------------------------------------
# Kernel 1: single LMU cell step (module semantics).
# Three accumulating MXU dots against row slices of the resident weight slab,
# one lane-dense (width N_P, multiple of 128) output store.
# ----------------------------------------------------------------------------
def _lmu_cell_kernel(x_ref, h_ref, m_ref, w_ref, o_ref, *,
                     input_size, hidden_size, MO, IN_P, H_P, MO_P):
    wd = w_ref.dtype
    acc = jnp.dot(x_ref[...].astype(wd), w_ref[0:input_size, :],
                  preferred_element_type=jnp.float32)
    acc += jnp.dot(h_ref[...].astype(wd), w_ref[IN_P:IN_P + hidden_size, :],
                   preferred_element_type=jnp.float32)
    acc += jnp.dot(m_ref[...].astype(wd),
                   w_ref[IN_P + H_P:IN_P + H_P + MO, :],
                   preferred_element_type=jnp.float32)
    # Columns [0:MO_P] -> m_new (padded), [MO_P:] -> tanh(h_pre) (padded).
    res = jnp.concatenate([acc[:, :MO_P], jnp.tanh(acc[:, MO_P:])], axis=-1)
    o_ref[...] = res.astype(o_ref.dtype)


def lmu_cell_forward(w_big, dims, x, h, m, *, batch_tile=256,
                     weight_single_buffer=False):
    """One LMU cell step.  w_big, dims come from fuse_lmu_weights (built once)."""
    bsz = x.shape[0]
    input_size = dims["input_size"]
    hidden_size = dims["hidden_size"]
    MO, MO_P = dims["MO"], dims["MO_P"]
    K_P, N_P = dims["K_P"], dims["N_P"]
    assert x.shape == (bsz, input_size)
    assert h.shape == (bsz, hidden_size) and m.shape == (bsz, MO)
    assert w_big.shape == (K_P, N_P)

    # Single block for small batches; otherwise tile the batch so v7x's two
    # TensorCores each take grid steps ("parallel" semantics).
    tile_b = bsz if bsz <= batch_tile else batch_tile
    grid = (pl.cdiv(bsz, tile_b),)

    if weight_single_buffer:
        # v7x (64 MiB VMEM): do not double-buffer the never-changing weights.
        w_spec = pl.BlockSpec((K_P, N_P), lambda i: (0, 0),
                              pipeline_mode=pl.Buffered(1))
    else:
        w_spec = pl.BlockSpec((K_P, N_P), lambda i: (0, 0))

    kernel = partial(_lmu_cell_kernel, input_size=input_size,
                     hidden_size=hidden_size, MO=MO,
                     IN_P=dims["IN_P"], H_P=dims["H_P"], MO_P=MO_P)

    out = pl.pallas_call(
        kernel,
        out_shape=jax.ShapeDtypeStruct((bsz, N_P), x.dtype),
        grid=grid,
        in_specs=[
            pl.BlockSpec((tile_b, input_size), lambda i: (i, 0)),
            pl.BlockSpec((tile_b, hidden_size), lambda i: (i, 0)),
            pl.BlockSpec((tile_b, MO), lambda i: (i, 0)),
            w_spec,  # same block every step -> DMA'd once, VMEM-resident
        ],
        out_specs=pl.BlockSpec((tile_b, N_P), lambda i: (i, 0)),
        compiler_params=pltpu.CompilerParams(
            dimension_semantics=("parallel",)),
    )(x, h, m, w_big)

    h_new = out[:, MO_P:MO_P + hidden_size]
    m_new = out[:, :MO]
    return h_new, m_new


# ----------------------------------------------------------------------------
# Kernel 2: sequence-fused LMU (cell applied T times inside ONE pallas_call).
# grid=(T,) "arbitrary"; x streamed per step; h/m carried in padded VMEM
# scratch; weight slab resident; lane-dense per-step output slab (T, B, N_P).
# ----------------------------------------------------------------------------
def _lmu_seq_kernel(x_ref, h0_ref, m0_ref, w_ref, o_ref, m_s, h_s, *,
                    input_size, hidden_size, MO, IN_P, H_P, MO_P):
    t = pl.program_id(0)

    @pl.when(t == 0)
    def _():
        m_s[...] = jnp.zeros_like(m_s)
        h_s[...] = jnp.zeros_like(h_s)
        m_s[:, 0:MO] = m0_ref[...].astype(jnp.float32)
        h_s[:, 0:hidden_size] = h0_ref[...].astype(jnp.float32)

    wd = w_ref.dtype
    x = x_ref[0]                                          # (B, input_size)
    acc = jnp.dot(x.astype(wd), w_ref[0:input_size, :],
                  preferred_element_type=jnp.float32)
    acc += jnp.dot(h_s[...].astype(wd), w_ref[IN_P:IN_P + H_P, :],
                   preferred_element_type=jnp.float32)
    acc += jnp.dot(m_s[...].astype(wd), w_ref[IN_P + H_P:, :],
                   preferred_element_type=jnp.float32)

    m_new = acc[:, :MO_P]            # pad columns stay exactly zero
    h_new = jnp.tanh(acc[:, MO_P:])  # tanh(0)=0 keeps pad columns zero
    m_s[...] = m_new
    h_s[...] = h_new
    o_ref[0] = jnp.concatenate([m_new, h_new], axis=-1).astype(o_ref.dtype)


def lmu_sequence_forward(w_big, dims, x_seq, h0, m0):
    """Apply the LMU cell over a whole (T, B, input) sequence in one kernel."""
    T, bsz, input_size = x_seq.shape
    hidden_size = dims["hidden_size"]
    MO, MO_P, H_P = dims["MO"], dims["MO_P"], dims["H_P"]
    K_P, N_P = dims["K_P"], dims["N_P"]
    assert input_size == dims["input_size"]
    assert h0.shape == (bsz, hidden_size) and m0.shape == (bsz, MO)

    kernel = partial(_lmu_seq_kernel, input_size=input_size,
                     hidden_size=hidden_size, MO=MO,
                     IN_P=dims["IN_P"], H_P=H_P, MO_P=MO_P)

    out = pl.pallas_call(
        kernel,
        out_shape=jax.ShapeDtypeStruct((T, bsz, N_P), x_seq.dtype),
        grid=(T,),
        in_specs=[
            pl.BlockSpec((1, bsz, input_size), lambda t: (t, 0, 0)),  # stream x
            pl.BlockSpec((bsz, hidden_size), lambda t: (0, 0)),       # h0 (read @ t=0)
            pl.BlockSpec((bsz, MO), lambda t: (0, 0)),                # m0 (read @ t=0)
            pl.BlockSpec((K_P, N_P), lambda t: (0, 0)),               # resident weights
        ],
        out_specs=pl.BlockSpec((1, bsz, N_P), lambda t: (t, 0, 0)),
        scratch_shapes=[
            pltpu.VMEM((bsz, MO_P), jnp.float32),   # m carried across steps
            pltpu.VMEM((bsz, H_P), jnp.float32),    # h carried across steps
        ],
        compiler_params=pltpu.CompilerParams(
            dimension_semantics=("arbitrary",)),
    )(x_seq, h0, m0, w_big)

    h_seq = out[:, :, MO_P:MO_P + hidden_size]   # (T, B, H)
    m_final = out[-1, :, :MO]                    # (B, MO)
    return h_seq, m_final


# ----------------------------------------------------------------------------
# Pure-JAX reference (mirrors the PyTorch forward exactly) for validation.
# ----------------------------------------------------------------------------
def lmu_cell_reference(params, x, h, m, *, memory_d, order):
    u = x @ params["e_x"].T + h @ params["e_h"].T + m @ params["e_m"].T
    m3 = m.reshape(-1, memory_d, order)
    m3 = m3 @ params["A"].T + u[..., None] @ params["B"].T
    m_new = m3.reshape(-1, memory_d * order)
    h_new = jnp.tanh(h @ params["W_h"].T + m_new @ params["W_m"].T
                     + x @ params["W_x"].T)
    return h_new, m_new


if __name__ == "__main__":
    input_size = 16
    memory_d = 4
    order = 8
    hidden_size = 32
    theta = 8
    batch = 2
    seq_len = 8

    key = jax.random.PRNGKey(0)
    kp, kx, kh, km, ks = jax.random.split(key, 5)

    params = init_lmu_params(kp, input_size, memory_d, order, hidden_size, theta)
    # Build the fused, lane-aligned matmul operand ONCE (outside the hot path).
    # Use dtype=jnp.bfloat16 here for the bf16 MXU path on v6e/v7x.
    w_big, dims = fuse_lmu_weights(params, dtype=jnp.float32)

    x = jax.random.normal(kx, (batch, input_size), jnp.float32)
    h0 = jax.random.normal(kh, (batch, hidden_size), jnp.float32)
    m0 = jax.random.normal(km, (batch, memory_d * order), jnp.float32)

    # --- single-step cell (module semantics) ---
    h1, m1 = lmu_cell_forward(w_big, dims, x, h0, m0)
    jax.block_until_ready((h1, m1))
    h1_ref, m1_ref = lmu_cell_reference(params, x, h0, m0,
                                        memory_d=memory_d, order=order)
    assert jnp.allclose(h1, h1_ref, atol=1e-4, rtol=1e-4), "h mismatch"
    assert jnp.allclose(m1, m1_ref, atol=1e-4, rtol=1e-4), "m mismatch"

    # --- sequence-fused kernel (cell applied T times in one pallas_call) ---
    x_seq = jax.random.normal(ks, (seq_len, batch, input_size), jnp.float32)
    h_seq, m_T = lmu_sequence_forward(w_big, dims, x_seq, h0, m0)
    jax.block_until_ready((h_seq, m_T))

    def ref_step(carry, xt):
        h, m = carry
        h2, m2 = lmu_cell_reference(params, xt, h, m,
                                    memory_d=memory_d, order=order)
        return (h2, m2), h2

    (hT_ref, mT_ref), h_seq_ref = jax.lax.scan(ref_step, (h0, m0), x_seq)
    assert jnp.allclose(h_seq, h_seq_ref, atol=1e-3, rtol=1e-3), "seq h mismatch"
    assert jnp.allclose(m_T, mT_ref, atol=1e-3, rtol=1e-3), "seq m mismatch"

    print("KERNEL_OK")
</pallas_src>

<mosaic_0001>
module attributes {stable_mosaic.version = 11 : i64} {
  func.func @_lmu_cell_kernel(%arg0: i32, %arg1: memref<2x16xf32, #tpu.memory_space<vmem>>, %arg2: memref<2x32xf32, #tpu.memory_space<vmem>>, %arg3: memref<2x32xf32, #tpu.memory_space<vmem>>, %arg4: memref<384x256xf32, #tpu.memory_space<vmem>>, %arg5: memref<2x256xf32, #tpu.memory_space<vmem>>) attributes {dimension_semantics = [#tpu.dimension_semantics<parallel>], iteration_bounds = array<i64: 1>, scalar_prefetch = 0 : i64, scratch_operands = 0 : i64, tpu.core_type = #tpu.core_type<tc>, window_params = [{transform_indices = @transform_0, window_bounds = array<i64: 2, 16>}, {transform_indices = @transform_1, window_bounds = array<i64: 2, 32>}, {transform_indices = @transform_2, window_bounds = array<i64: 2, 32>}, {pipeline_mode = #tpu.pipeline_mode<synchronous>, transform_indices = @transform_3, window_bounds = array<i64: 384, 256>}, {transform_indices = @transform_4, window_bounds = array<i64: 2, 256>}]} {
    %c0 = arith.constant 0 : index
    %c0_0 = arith.constant 0 : index
    %0 = vector.load %arg1[%c0, %c0_0] : memref<2x16xf32, #tpu.memory_space<vmem>>, vector<2x16xf32>
    %c0_1 = arith.constant 0 : index
    %c0_2 = arith.constant 0 : index
    %1 = vector.load %arg4[%c0_1, %c0_2] : memref<384x256xf32, #tpu.memory_space<vmem>>, vector<16x256xf32>
    %cst = arith.constant dense<0.000000e+00> : vector<2x256xf32>
    %2 = tpu.matmul %0, %1, %cst {dimension_numbers = #tpu.dot_dimension_numbers<[1], [0], [0], [1], [0, 0, 1, 1], [], []>} : vector<2x16xf32>, vector<16x256xf32>, vector<2x256xf32> -> vector<2x256xf32>
    %c0_3 = arith.constant 0 : index
    %c0_4 = arith.constant 0 : index
    %3 = vector.load %arg2[%c0_3, %c0_4] : memref<2x32xf32, #tpu.memory_space<vmem>>, vector<2x32xf32>
    %c128 = arith.constant 128 : index
    %c0_5 = arith.constant 0 : index
    %4 = vector.load %arg4[%c128, %c0_5] : memref<384x256xf32, #tpu.memory_space<vmem>>, vector<32x256xf32>
    %cst_6 = arith.constant dense<0.000000e+00> : vector<2x256xf32>
    %5 = tpu.matmul %3, %4, %cst_6 {dimension_numbers = #tpu.dot_dimension_numbers<[1], [0], [0], [1], [0, 0, 1, 1], [], []>} : vector<2x32xf32>, vector<32x256xf32>, vector<2x256xf32> -> vector<2x256xf32>
    %6 = arith.addf %2, %5 : vector<2x256xf32>
    %c0_7 = arith.constant 0 : index
    %c0_8 = arith.constant 0 : index
    %7 = vector.load %arg3[%c0_7, %c0_8] : memref<2x32xf32, #tpu.memory_space<vmem>>, vector<2x32xf32>
    %c256 = arith.constant 256 : index
    %c0_9 = arith.constant 0 : index
    %8 = vector.load %arg4[%c256, %c0_9] : memref<384x256xf32, #tpu.memory_space<vmem>>, vector<32x256xf32>
    %cst_10 = arith.constant dense<0.000000e+00> : vector<2x256xf32>
    %9 = tpu.matmul %7, %8, %cst_10 {dimension_numbers = #tpu.dot_dimension_numbers<[1], [0], [0], [1], [0, 0, 1, 1], [], []>} : vector<2x32xf32>, vector<32x256xf32>, vector<2x256xf32> -> vector<2x256xf32>
    %10 = arith.addf %6, %9 : vector<2x256xf32>
    %11 = vector.extract_strided_slice %10 {offsets = [0, 0], sizes = [2, 128], strides = [1, 1]} : vector<2x256xf32> to vector<2x128xf32>
    %12 = vector.extract_strided_slice %10 {offsets = [0, 128], sizes = [2, 128], strides = [1, 1]} : vector<2x256xf32> to vector<2x128xf32>
    %13 = math.tanh %12 : vector<2x128xf32>
    %14 = tpu.concatenate %11, %13 in 1 : vector<2x128xf32>, vector<2x128xf32> -> vector<2x256xf32>
    %c0_11 = arith.constant 0 : index
    %c0_12 = arith.constant 0 : index
    %15 = vector.load %arg5[%c0_11, %c0_12] : memref<2x256xf32, #tpu.memory_space<vmem>>, vector<2x256xf32>
    tpu.vector_store %arg5[%c0_11, %c0_12], %14 {strides = array<i32>} : memref<2x256xf32, #tpu.memory_space<vmem>>, vector<2x256xf32>,
    return
  }
  func.func @transform_0(%arg0: i32) -> (i32, i32) {
    %c0_i32 = arith.constant 0 : i32
    %c0_i32_0 = arith.constant 0 : i32
    return %arg0, %c0_i32 : i32, i32
  }
  func.func @transform_1(%arg0: i32) -> (i32, i32) {
    %c0_i32 = arith.constant 0 : i32
    %c0_i32_0 = arith.constant 0 : i32
    return %arg0, %c0_i32 : i32, i32
  }
  func.func @transform_2(%arg0: i32) -> (i32, i32) {
    %c0_i32 = arith.constant 0 : i32
    %c0_i32_0 = arith.constant 0 : i32
    return %arg0, %c0_i32 : i32, i32
  }
  func.func @transform_3(%arg0: i32) -> (i32, i32) {
    %c0_i32 = arith.constant 0 : i32
    %c0_i32_0 = arith.constant 0 : i32
    %c0_i32_1 = arith.constant 0 : i32
    return %c0_i32, %c0_i32_0 : i32, i32
  }
  func.func @transform_4(%arg0: i32) -> (i32, i32) {
    %c0_i32 = arith.constant 0 : i32
    %c0_i32_0 = arith.constant 0 : i32
    return %arg0, %c0_i32 : i32, i32
  }
}

</mosaic_0001>

<llo_original>
// kernel: tpu_custom_call.1
$region0: #{tpu_custom_call.1}
  #allocation0 [shape = 'u32[]', space=smem, size = 0x4, offset = 0x4, fixed_abs, tag = 'smem constant byte address 0x4 - core index']
  #allocation1 [shape = 'u32[144,128]{1,0:T(1,128)}', space=vmem, size = 0x12000, scoped, tag = 'internal scratch']
  %s0 = inlined_call_operand.hbm [shape: f32[2,16], index: 0, kind: input, shape index: {}]
  %s1 = inlined_call_operand.vmem [shape: f32[2,32], index: 1, kind: input, shape index: {}]
  %s2 = inlined_call_operand.vmem [shape: f32[2,32], index: 2, kind: input, shape index: {}]
  %s3 = inlined_call_operand.hbm [shape: f32[384,256], index: 3, kind: input, shape index: {}]
  %s4 = inlined_call_operand.hbm [shape: f32[2,256], index: 4, kind: output, shape index: {}]
  %s5 = sld [smem:[#allocation0]]
  $region34: #{tpu_custom_call.1} parent=0
    _
  %s7 = ssub.s32 1, %s5
  %s8 = scalar_select 0, %s7, %s5
  $region1: #{tpu_custom_call.1} parent=0
    #allocation2 [shape = 'u8[1024]{0}', space=vmem, size = 0x400, scoped, tag = 'input window, operand 0, single buffered']
    #allocation3 [shape = 's32[1]{0}', space=sflag, size = 0x4, scoped, tag = 'scoped memory for tpu_custom_call.1']
    #allocation4 [shape = 's32[1]{0}', space=sflag, size = 0x4, scoped, tag = 'scoped memory for tpu_custom_call.1']
    #allocation5 [shape = 'u8[393216]{0}', space=vmem, size = 0x60000, scoped, tag = 'input window, operand 3, single buffered']
    #allocation6 [shape = 's32[1]{0}', space=sflag, size = 0x4, scoped, tag = 'scoped memory for tpu_custom_call.1']
    #allocation7 [shape = 'u8[2048]{0}', space=vmem, size = 0x800, scoped, tag = 'output window, operand 0, single buffered']
    %9 = vsyncpa [#allocation3], 0
    %10 = vsyncpa [#allocation6], 0
    %11 = vsyncpa [#allocation4], 0
    // Predicated region
    $region2: #{tpu_custom_call.1} parent=1 // pred_check
      _
    $region3: #{tpu_custom_call.1} parent=1 // pred_check_branch
      %13 = sbr.rel (0) target = $region5
    $region4: #{tpu_custom_call.1} parent=1 // pred_region
      %s15 = ssub.s32 32, 32
      %16 = vsyncadd [#allocation3], %s15
      %s18 = sshll.u32 [#allocation2], 4
      %s19 = int_to_ptr.vmem [resolvable:$true] %s18
      %21 = dma.hbm_to_vmem [thread:$0]  %s0, 32, %s19, [#allocation3]
    $region5: #{tpu_custom_call.1} parent=1 // pred_fallthru
      _
    // Predicated region
    $region6: #{tpu_custom_call.1} parent=1 // pred_check
      _
    $region7: #{tpu_custom_call.1} parent=1 // pred_check_branch
      %23 = sbr.rel (0) target = $region9
    $region8: #{tpu_custom_call.1} parent=1 // pred_region
      _
    $region9: #{tpu_custom_call.1} parent=1 // pred_fallthru
      _
    // Predicated region
    $region10: #{tpu_custom_call.1} parent=1 // pred_check
      _
    $region11: #{tpu_custom_call.1} parent=1 // pred_check_branch
      %25 = sbr.rel (0) target = $region13
    $region12: #{tpu_custom_call.1} parent=1 // pred_region
      _
    $region13: #{tpu_custom_call.1} parent=1 // pred_fallthru
      _
    // Predicated region
    $region14: #{tpu_custom_call.1} parent=1 // pred_check
      _
    $region15: #{tpu_custom_call.1} parent=1 // pred_check_branch
      %27 = sbr.rel (0) target = $region17
    $region16: #{tpu_custom_call.1} parent=1 // pred_region
      %s29 = ssub.s32 12288, 12288
      %30 = vsyncadd [#allocation6], %s29
      %s31 = sshll.u32 [#allocation5], 4
      %s32 = int_to_ptr.vmem [resolvable:$true] %s31
      %37 = dma.hbm_to_vmem [thread:$0]  %s3, 12288, %s32, [#allocation6], 256, 256, 16
    $region17: #{tpu_custom_call.1} parent=1 // pred_fallthru
      _
    // Predicated region
    $region18: #{tpu_custom_call.1} parent=1 // pred_check
      _
    $region19: #{tpu_custom_call.1} parent=1 // pred_check_branch
      %39 = sbr.rel (0) target = $region21
    $region20: #{tpu_custom_call.1} parent=1 // pred_region
      %40 = dma.done [#allocation3], 32
    $region21: #{tpu_custom_call.1} parent=1 // pred_fallthru
      _
    // Predicated region
    $region22: #{tpu_custom_call.1} parent=1 // pred_check
      _
    $region23: #{tpu_custom_call.1} parent=1 // pred_check_branch
      %42 = sbr.rel (0) target = $region25
    $region24: #{tpu_custom_call.1} parent=1 // pred_region
      %43 = dma.done [#allocation6], 12288
    $region25: #{tpu_custom_call.1} parent=1 // pred_fallthru
      _
    %v44 = vld [vmem:[#allocation2] sm:$0x3]
    %v45 = vld [vmem:[#allocation5] sm:$0xff]
    %v46 = vld [vmem:[#allocation5 + $0x8] sm:$0xff]
    %v47 = vld [vmem:[#allocation5 + $0x10] sm:$0xff]
    %v48 = vld [vmem:[#allocation5 + $0x18] sm:$0xff]
    %v49 = vld [vmem:[%s1] sm:$0x3]
    %v50 = vld [vmem:[#allocation5 + $0x100] sm:$0xff]
    %v51 = vld [vmem:[#allocation5 + $0x108] sm:$0xff]
    %v52 = vld [vmem:[#allocation5 + $0x110] sm:$0xff]
    %v53 = vld [vmem:[#allocation5 + $0x118] sm:$0xff]
    %v54 = vld [vmem:[#allocation5 + $0x120] sm:$0xff]
    %v55 = vld [vmem:[#allocation5 + $0x128] sm:$0xff]
    %v56 = vld [vmem:[#allocation5 + $0x130] sm:$0xff]
    %v57 = vld [vmem:[#allocation5 + $0x138] sm:$0xff]
    %vm58 = vcmask 261120
    %v60 = vsel %vm58, %v49, 0
    %62 = vmatprep.subr.mxu0 %v51
    %63 = vmatpush1.msra.mxu0 %v50
    %64 = vmatprep.subr.mxu0 %v53
    %65 = vmatpush1.msra.mxu0 %v52
    %66 = vmatprep.subr.mxu0 %v55
    %67 = vmatpush1.msra.mxu0 %v54
    %68 = vmatprep.subr.mxu0 %v57
    %69 = vmatpush1.msra.mxu0 %v56
    %70 = vmatprep.subr.mxu0 0.0
    %71 = vmatpush1.msra.mxu0 0.0
    %72 = vmatprep.subr.mxu0 0.0
    %73 = vmatpush1.msra.mxu0 0.0
    %74 = vmatprep.subr.mxu0 0.0
    %75 = vmatpush1.msra.mxu0 0.0
    %76 = vmatprep.subr.mxu0 0.0
    %77 = vmatpush1.msra.mxu0 0.0
    %78 = vmatprep.subr.mxu0 0.0
    %79 = vmatpush1.msra.mxu0 0.0
    %80 = vmatprep.subr.mxu0 0.0
    %81 = vmatpush1.msra.mxu0 0.0
    %82 = vmatprep.subr.mxu0 0.0
    %83 = vmatpush1.msra.mxu0 0.0
    %84 = vmatprep.subr.mxu0 0.0
    %85 = vmatpush1.msra.mxu0 0.0
    %86 = vmatprep.subr.mxu0 0.0
    %87 = vmatpush1.msra.mxu0 0.0
    %88 = vmatprep.subr.mxu0 0.0
    %89 = vmatpush1.msra.mxu0 0.0
    %90 = vmatprep.subr.mxu0 0.0
    %91 = vmatpush1.msra.mxu0 0.0
    %92 = vmatprep.subr.mxu0 0.0
    %93 = vmatpush1.msra.mxu0 0.0
    %94 = vmatprep.subr.mxu0 0.0
    %95 = vmatpush1.msra.mxu0 0.0
    %96 = vmatprep.subr.mxu0 0.0
    %97 = vmatpush1.msra.mxu0 0.0
    %98 = vmatprep.subr.mxu0 0.0
    %99 = vmatpush1.msra.mxu0 0.0
    %100 = vmatprep.subr.mxu0 0.0
    %101 = vmatpush1.msra.mxu0 0.0
    %102 = vmatprep.subr.mxu0 0.0
    %103 = vmatpush1.msra.mxu0 0.0
    %104 = vmatprep.subr.mxu0 0.0
    %105 = vmatpush1.msra.mxu0 0.0
    %106 = vmatprep.subr.mxu0 0.0
    %107 = vmatpush1.msra.mxu0 0.0
    %108 = vmatprep.subr.mxu0 0.0
    %109 = vmatpush1.msra.mxu0 0.0
    %110 = vmatprep.subr.mxu0 0.0
    %111 = vmatpush1.msra.mxu0 0.0
    %112 = vmatprep.subr.mxu0 0.0
    %113 = vmatpush1.msra.mxu0 0.0
    %114 = vmatprep.subr.mxu0 0.0
    %115 = vmatpush1.msra.mxu0 0.0
    %116 = vmatprep.subr.mxu0 0.0
    %117 = vmatpush1.msra.mxu0 0.0
    %118 = vmatprep.subr.mxu0 0.0
    %119 = vmatpush1.msra.mxu0 0.0
    %120 = vmatprep.subr.mxu0 0.0
    %121 = vmatpush1.msra.mxu0 0.0
    %122 = vmatprep.subr.mxu0 0.0
    %123 = vmatpush1.msra.mxu0 0.0
    %124 = vmatprep.subr.mxu0 0.0
    %125 = vmatpush1.msra.mxu0 0.0
    %126 = vmatprep.mubr.f32.mxu0 0.0
    %127 = vmatmul.mubr.f32.gmra.mrb[0].mxu0 %v60
    %v128 = vpop.f32.mrb[0].mxu0
    %v129 = vadd.f32 0.0, %v128
    %v130 = vpop.f32.mrb[0].mxu0
    %v131 = vadd.f32 0.0, %v130
    %132 = vdwg.mxu0
    %vm133 = vcmask 130048
    %v135 = vsel %vm133, %v44, 0
    %137 = vmatprep.subr.mxu0 %v46
    %138 = vmatpush1.msra.mxu0 %v45
    %139 = vmatprep.subr.mxu0 %v48
    %140 = vmatpush1.msra.mxu0 %v47
    %141 = vmatprep.subr.mxu0 0.0
    %142 = vmatpush1.msra.mxu0 0.0
    %143 = vmatprep.subr.mxu0 0.0
    %144 = vmatpush1.msra.mxu0 0.0
    %145 = vmatprep.subr.mxu0 0.0
    %146 = vmatpush1.msra.mxu0 0.0
    %147 = vmatprep.subr.mxu0 0.0
    %148 = vmatpush1.msra.mxu0 0.0
    %149 = vmatprep.subr.mxu0 0.0
    %150 = vmatpush1.msra.mxu0 0.0
    %151 = vmatprep.subr.mxu0 0.0
    %152 = vmatpush1.msra.mxu0 0.0
    %153 = vmatprep.subr.mxu0 0.0
    %154 = vmatpush1.msra.mxu0 0.0
    %155 = vmatprep.subr.mxu0 0.0
    %156 = vmatpush1.msra.mxu0 0.0
    %157 = vmatprep.subr.mxu0 0.0
    %158 = vmatpush1.msra.mxu0 0.0
    %159 = vmatprep.subr.mxu0 0.0
    %160 = vmatpush1.msra.mxu0 0.0
    %161 = vmatprep.subr.mxu0 0.0
    %162 = vmatpush1.msra.mxu0 0.0
    %163 = vmatprep.subr.mxu0 0.0
    %164 = vmatpush1.msra.mxu0 0.0
    %165 = vmatprep.subr.mxu0 0.0
    %166 = vmatpush1.msra.mxu0 0.0
    %167 = vmatprep.subr.mxu0 0.0
    %168 = vmatpush1.msra.mxu0 0.0
    %169 = vmatprep.subr.mxu0 0.0
    %170 = vmatpush1.msra.mxu0 0.0
    %171 = vmatprep.subr.mxu0 0.0
    %172 = vmatpush1.msra.mxu0 0.0
    %173 = vmatprep.subr.mxu0 0.0
    %174 = vmatpush1.msra.mxu0 0.0
    %175 = vmatprep.subr.mxu0 0.0
    %176 = vmatpush1.msra.mxu0 0.0
    %177 = vmatprep.subr.mxu0 0.0
    %178 = vmatpush1.msra.mxu0 0.0
    %179 = vmatprep.subr.mxu0 0.0
    %180 = vmatpush1.msra.mxu0 0.0
    %181 = vmatprep.subr.mxu0 0.0
    %182 = vmatpush1.msra.mxu0 0.0
    %183 = vmatprep.subr.mxu0 0.0
    %184 = vmatpush1.msra.mxu0 0.0
    %185 = vmatprep.subr.mxu0 0.0
    %186 = vmatpush1.msra.mxu0 0.0
    %187 = vmatprep.subr.mxu0 0.0
    %188 = vmatpush1.msra.mxu0 0.0
    %189 = vmatprep.subr.mxu0 0.0
    %190 = vmatpush1.msra.mxu0 0.0
    %191 = vmatprep.subr.mxu0 0.0
    %192 = vmatpush1.msra.mxu0 0.0
    %193 = vmatprep.subr.mxu0 0.0
    %194 = vmatpush1.msra.mxu0 0.0
    %195 = vmatprep.subr.mxu0 0.0
    %196 = vmatpush1.msra.mxu0 0.0
    %197 = vmatprep.subr.mxu0 0.0
    %198 = vmatpush1.msra.mxu0 0.0
    %199 = vmatprep.subr.mxu0 0.0
    %200 = vmatpush1.msra.mxu0 0.0
    %201 = vmatprep.mubr.f32.mxu0 0.0
    %202 = vmatmul.mubr.f32.gmra.mrb[0].mxu0 %v135
    %v203 = vpop.f32.mrb[0].mxu0
    %v204 = vadd.f32 %v129, %v203
    %v205 = vpop.f32.mrb[0].mxu0
    %v206 = vadd.f32 %v131, %v205
    %207 = vdwg.mxu0
    %v208 = vld [vmem:[%s2] sm:$0x3]
    %v209 = vld [vmem:[#allocation5 + $0x200] sm:$0xff]
    %v210 = vld [vmem:[#allocation5 + $0x208] sm:$0xff]
    %v211 = vld [vmem:[#allocation5 + $0x210] sm:$0xff]
    %v212 = vld [vmem:[#allocation5 + $0x218] sm:$0xff]
    %v213 = vld [vmem:[#allocation5 + $0x220] sm:$0xff]
    %v214 = vld [vmem:[#allocation5 + $0x228] sm:$0xff]
    %v215 = vld [vmem:[#allocation5 + $0x230] sm:$0xff]
    %v216 = vld [vmem:[#allocation5 + $0x238] sm:$0xff]
    %v218 = vsel %vm58, %v208, 0
    %220 = vmatprep.subr.mxu0 %v210
    %221 = vmatpush1.msra.mxu0 %v209
    %222 = vmatprep.subr.mxu0 %v212
    %223 = vmatpush1.msra.mxu0 %v211
    %224 = vmatprep.subr.mxu0 %v214
    %225 = vmatpush1.msra.mxu0 %v213
    %226 = vmatprep.subr.mxu0 %v216
    %227 = vmatpush1.msra.mxu0 %v215
    %228 = vmatprep.subr.mxu0 0.0
    %229 = vmatpush1.msra.mxu0 0.0
    %230 = vmatprep.subr.mxu0 0.0
    %231 = vmatpush1.msra.mxu0 0.0
    %232 = vmatprep.subr.mxu0 0.0
    %233 = vmatpush1.msra.mxu0 0.0
    %234 = vmatprep.subr.mxu0 0.0
    %235 = vmatpush1.msra.mxu0 0.0
    %236 = vmatprep.subr.mxu0 0.0
    %237 = vmatpush1.msra.mxu0 0.0
    %238 = vmatprep.subr.mxu0 0.0
    %239 = vmatpush1.msra.mxu0 0.0
    %240 = vmatprep.subr.mxu0 0.0
    %241 = vmatpush1.msra.mxu0 0.0
    %242 = vmatprep.subr.mxu0 0.0
    %243 = vmatpush1.msra.mxu0 0.0
    %244 = vmatprep.subr.mxu0 0.0
    %245 = vmatpush1.msra.mxu0 0.0
    %246 = vmatprep.subr.mxu0 0.0
    %247 = vmatpush1.msra.mxu0 0.0
    %248 = vmatprep.subr.mxu0 0.0
    %249 = vmatpush1.msra.mxu0 0.0
    %250 = vmatprep.subr.mxu0 0.0
    %251 = vmatpush1.msra.mxu0 0.0
    %252 = vmatprep.subr.mxu0 0.0
    %253 = vmatpush1.msra.mxu0 0.0
    %254 = vmatprep.subr.mxu0 0.0
    %255 = vmatpush1.msra.mxu0 0.0
    %256 = vmatprep.subr.mxu0 0.0
    %257 = vmatpush1.msra.mxu0 0.0
    %258 = vmatprep.subr.mxu0 0.0
    %259 = vmatpush1.msra.mxu0 0.0
    %260 = vmatprep.subr.mxu0 0.0
    %261 = vmatpush1.msra.mxu0 0.0
    %262 = vmatprep.subr.mxu0 0.0
    %263 = vmatpush1.msra.mxu0 0.0
    %264 = vmatprep.subr.mxu0 0.0
    %265 = vmatpush1.msra.mxu0 0.0
    %266 = vmatprep.subr.mxu0 0.0
    %267 = vmatpush1.msra.mxu0 0.0
    %268 = vmatprep.subr.mxu0 0.0
    %269 = vmatpush1.msra.mxu0 0.0
    %270 = vmatprep.subr.mxu0 0.0
    %271 = vmatpush1.msra.mxu0 0.0
    %272 = vmatprep.subr.mxu0 0.0
    %273 = vmatpush1.msra.mxu0 0.0
    %274 = vmatprep.subr.mxu0 0.0
    %275 = vmatpush1.msra.mxu0 0.0
    %276 = vmatprep.subr.mxu0 0.0
    %277 = vmatpush1.msra.mxu0 0.0
    %278 = vmatprep.subr.mxu0 0.0
    %279 = vmatpush1.msra.mxu0 0.0
    %280 = vmatprep.subr.mxu0 0.0
    %281 = vmatpush1.msra.mxu0 0.0
    %282 = vmatprep.subr.mxu0 0.0
    %283 = vmatpush1.msra.mxu0 0.0
    %284 = vmatprep.mubr.f32.mxu0 0.0
    %285 = vmatmul.mubr.f32.gmra.mrb[0].mxu0 %v218
    %v286 = vpop.f32.mrb[0].mxu0
    %v287 = vadd.f32 0.0, %v286
    %v288 = vpop.f32.mrb[0].mxu0
    %v289 = vadd.f32 0.0, %v288
    %290 = vdwg.mxu0
    %v291 = vadd.f32 %v204, %v287
    %v292 = vadd.f32 %v206, %v289
    %v293 = vtanh.pop %v292
    %v296 = vcombine.low %v291, %v293
    %v298 = vunpack.c.l.s4 1983009808
    %v299 = vunpack.c.0.s8 %v298
    %v300 = vlaneseq
    %v301 = vshrl.u32 %v300, 7
    %v302 = vsub.s32 %v299, %v301
    %v303 = vrot.slane %v296, %v302
    %305 = vst [vmem:[#allocation7] sm:$0xf] %v303
    // Predicated region
    $region26: #{tpu_custom_call.1} parent=1 // pred_check
      _
    $region27: #{tpu_custom_call.1} parent=1 // pred_check_branch
      %307 = sbr.rel (0) target = $region29
    $region28: #{tpu_custom_call.1} parent=1 // pred_region
      %s309 = ssub.s32 64, 64
      %310 = vsyncadd [#allocation4], %s309
      %s312 = sshll.u32 [#allocation7], 4
      %s313 = int_to_ptr.vmem [resolvable:$true] %s312
      %315 = dma.vmem_to_hbm [thread:$0]  %s313, 64, %s4, [#allocation4]
    $region29: #{tpu_custom_call.1} parent=1 // pred_fallthru
      _
    // Predicated region
    $region30: #{tpu_custom_call.1} parent=1 // pred_check
      _
    $region31: #{tpu_custom_call.1} parent=1 // pred_check_branch
      %317 = sbr.rel (0) target = $region33
    $region32: #{tpu_custom_call.1} parent=1 // pred_region
      %318 = dma.done [#allocation4], 64
    $region33: #{tpu_custom_call.1} parent=1 // pred_fallthru
      _
    %319 = vsyncpa [#allocation3], 1
    %320 = vsyncpa [#allocation6], 1
    %321 = vsyncpa [#allocation4], 1

</llo_original>
